<compile_context>
chip_gen: v5e
topology: v5e:2x2
jax: 0.10.0
libtpu: 0.0.40
codegen_flags: <defaults>
</compile_context>

<pallas_src>
import jax
import jax.numpy as jnp
from jax.experimental import pallas as pl
from jax.experimental.pallas import tpu as pltpu


def _round_up(x, m):
    return ((x + m - 1) // m) * m


def _fr_kernel(feat_ref, noise_ref, w1_ref, b1_ref,
               w3mu_ref, b3mu_ref, w3std_ref, b3std_ref,
               wd_ref, bd_ref, wc_ref, bc_ref, out_ref):
    A = w3mu_ref.shape[1]          # padded attSize (multiple of 128)
    C = wc_ref.shape[1]            # padded nclass  (multiple of 128)

    # hidden = LeakyReLU(0.2)(fc1(feat))   -- bf16 matmul, f32 accumulate/epilogue
    x = feat_ref[...]                                          # (TB, res) bf16
    hidden = jnp.dot(x, w1_ref[...],
                     preferred_element_type=jnp.float32) + b1_ref[...]
    hidden = jnp.where(hidden > 0, hidden, 0.2 * hidden)
    hidden_bf = hidden.astype(jnp.bfloat16)

    # fc3 split into mu / std halves (lane-aligned, no column slicing).
    mus = jnp.dot(hidden_bf, w3mu_ref[...],
                  preferred_element_type=jnp.float32) + b3mu_ref[...]
    std_logits = jnp.dot(hidden_bf, w3std_ref[...],
                         preferred_element_type=jnp.float32) + b3std_ref[...]
    stds = jax.nn.sigmoid(std_logits)

    # reparameterization: encoder_out = noise * stds + mus
    enc = noise_ref[...] * stds + mus
    h_out = jax.nn.sigmoid(enc)

    # discriminator(encoder_out): N=1 matmul -> VPU multiply + lane reduce.
    dis = jnp.sum(enc * wd_ref[...], axis=-1, keepdims=True) + bd_ref[...]
    dis_wide = jnp.broadcast_to(dis, (dis.shape[0], 128))

    # pred = log_softmax(classifier(mus)); padded classes carry -1e30 bias so
    # exp() -> 0 and real-class probabilities are unchanged.
    logits = jnp.dot(mus, wc_ref[...],
                     preferred_element_type=jnp.float32) + bc_ref[...]
    m = jnp.max(logits, axis=-1, keepdims=True)
    shifted = logits - m
    lse = jnp.log(jnp.sum(jnp.exp(shifted), axis=-1, keepdims=True))
    pred = shifted - lse

    # Single fused, lane-dense output slab (all offsets multiples of 128).
    out_ref[:, 0 * A:1 * A] = mus
    out_ref[:, 1 * A:2 * A] = stds
    out_ref[:, 2 * A:3 * A] = enc
    out_ref[:, 3 * A:4 * A] = h_out
    out_ref[:, 4 * A:4 * A + C] = pred
    out_ref[:, 4 * A + C:4 * A + C + 128] = dis_wide


def fr_forward(feat, params, noise):
    """FR forward pass (train_G=False, embedSz=0).

    Returns (mus, stds, dis_out, pred, encoder_out, h)."""
    w1, b1, w3, b3, wd, bd, wc, bc = params
    B, res = feat.shape
    ngh = w1.shape[1]
    att = w3.shape[1] // 2
    nclass = wc.shape[1]

    A = _round_up(att, 128)            # padded att width
    C = _round_up(nclass, 128)         # padded class width
    W = 4 * A + C + 128                # fused output slab width

    # Batch tile: multiple of 8 sublanes, pipelined over the grid.
    TB = 256 if B >= 256 else _round_up(B, 8)
    Bp = _round_up(B, TB)
    grid = (Bp // TB,)

    f32, bf16 = jnp.float32, jnp.bfloat16

    # ---- pad / cast operands (wrapper-side layout plumbing) ----
    feat_p = jnp.zeros((Bp, res), bf16).at[:B].set(feat.astype(bf16))
    noise_p = jnp.zeros((Bp, A), f32).at[:B, :att].set(noise.astype(f32))

    w1_b = w1.astype(bf16)
    b1_r = b1.reshape(1, -1).astype(f32)

    w3_mu = jnp.zeros((ngh, A), bf16).at[:, :att].set(w3[:, :att].astype(bf16))
    w3_st = jnp.zeros((ngh, A), bf16).at[:, :att].set(w3[:, att:].astype(bf16))
    b3_mu = jnp.zeros((1, A), f32).at[0, :att].set(b3[:att].astype(f32))
    b3_st = jnp.zeros((1, A), f32).at[0, :att].set(b3[att:].astype(f32))

    wd_row = jnp.zeros((1, A), f32).at[0, :att].set(wd[:, 0].astype(f32))
    bd_r = bd.reshape(1, 1).astype(f32)

    wc_p = jnp.zeros((A, C), f32).at[:att, :nclass].set(wc.astype(f32))
    bc_p = jnp.full((1, C), -1e30, f32).at[0, :nclass].set(bc.astype(f32))

    resident = lambda i: (0, 0)        # weights: same block every grid step
    batched = lambda i: (i, 0)         # activations: tiled over batch

    in_specs = [
        pl.BlockSpec((TB, res), batched),     # feat (bf16)
        pl.BlockSpec((TB, A), batched),       # noise (f32)
        pl.BlockSpec((res, ngh), resident),   # w1
        pl.BlockSpec((1, ngh), resident),     # b1
        pl.BlockSpec((ngh, A), resident),     # w3_mu
        pl.BlockSpec((1, A), resident),       # b3_mu
        pl.BlockSpec((ngh, A), resident),     # w3_std
        pl.BlockSpec((1, A), resident),       # b3_std
        pl.BlockSpec((1, A), resident),       # wd row
        pl.BlockSpec((1, 1), resident),       # bd
        pl.BlockSpec((A, C), resident),       # wc (padded)
        pl.BlockSpec((1, C), resident),       # bc (padded, -1e30 on pad cols)
    ]
    out_specs = pl.BlockSpec((TB, W), batched)
    out_shape = jax.ShapeDtypeStruct((Bp, W), f32)

    # ---- VMEM budget & cost hint ----
    weight_bytes = (res * ngh * 2 + 2 * ngh * A * 2 + A * C * 4
                    + (ngh + 3 * A + C + 1) * 4)
    tile_bytes = TB * (res * 2 + A * 4 + W * 4)     # streamed per grid step
    interm_bytes = TB * (ngh * 8 + 6 * A * 4 + 2 * C * 4)
    vmem_limit = int(min(max(weight_bytes + 3 * tile_bytes + interm_bytes
                             + (8 << 20), 32 << 20), 112 << 20))

    flops = 2 * Bp * (res * ngh + 2 * ngh * A + A * C + A)
    transcendentals = Bp * (2 * A + C + 1)
    bytes_accessed = (Bp * res * 2 + Bp * A * 4 + Bp * W * 4
                      + grid[0] * weight_bytes)
    cost = pl.CostEstimate(flops=flops, transcendentals=transcendentals,
                           bytes_accessed=bytes_accessed)

    out = pl.pallas_call(
        _fr_kernel,
        out_shape=out_shape,
        grid=grid,
        in_specs=in_specs,
        out_specs=out_specs,
        compiler_params=pltpu.CompilerParams(
            dimension_semantics=("parallel",),
            vmem_limit_bytes=vmem_limit),
        cost_estimate=cost,
    )(feat_p, noise_p, w1_b, b1_r, w3_mu, b3_mu, w3_st, b3_st,
      wd_row, bd_r, wc_p, bc_p)

    mus = out[:B, 0 * A:0 * A + att]
    stds = out[:B, 1 * A:1 * A + att]
    enc = out[:B, 2 * A:2 * A + att]
    h = out[:B, 3 * A:3 * A + att]
    pred = out[:B, 4 * A:4 * A + nclass]
    dis = out[:B, 4 * A + C:4 * A + C + 1]
    return mus, stds, dis, pred, enc, h


def init_params(key, res_size, ngh, att_size, nclass_seen):
    """Deterministic init mirroring weights_init: W ~ N(0, 0.02), b = 0."""
    k1, k3, kd, kc = jax.random.split(key, 4)
    w1 = 0.02 * jax.random.normal(k1, (res_size, ngh), jnp.float32)
    b1 = jnp.zeros((ngh,), jnp.float32)
    w3 = 0.02 * jax.random.normal(k3, (ngh, att_size * 2), jnp.float32)
    b3 = jnp.zeros((att_size * 2,), jnp.float32)
    wd = 0.02 * jax.random.normal(kd, (att_size, 1), jnp.float32)
    bd = jnp.zeros((1,), jnp.float32)
    wc = 0.02 * jax.random.normal(kc, (att_size, nclass_seen), jnp.float32)
    bc = jnp.zeros((nclass_seen,), jnp.float32)
    return (w1, b1, w3, b3, wd, bd, wc, bc)


def _fr_reference(feat, params, noise):
    """Pure-JAX f32 reference mirroring the PyTorch FR forward (train_G=False)."""
    w1, b1, w3, b3, wd, bd, wc, bc = params
    att = w3.shape[1] // 2
    hidden = feat @ w1 + b1
    hidden = jnp.where(hidden > 0, hidden, 0.2 * hidden)
    lantent = hidden @ w3 + b3
    mus, stds = lantent[:, :att], jax.nn.sigmoid(lantent[:, att:])
    enc = noise * stds + mus
    dis = enc @ wd + bd
    pred = jax.nn.log_softmax(mus @ wc + bc, axis=1)
    return mus, stds, dis, pred, enc, jax.nn.sigmoid(enc)


if __name__ == "__main__":
    # Small, self-consistent shapes.
    B = 8            # batch
    RES_SIZE = 32    # opt.resSize
    NGH = 64         # opt.ngh
    ATT_SIZE = 16    # opt.attSize / attSize
    NCLASS = 10      # opt.nclass_seen

    key = jax.random.PRNGKey(0)
    k_feat, k_noise, k_params = jax.random.split(key, 3)

    feat = jax.random.normal(k_feat, (B, RES_SIZE), jnp.float32)
    # reparameterization noise (equivalent to torch.randn_like(mus))
    noise = jax.random.normal(k_noise, (B, ATT_SIZE), jnp.float32)
    params = init_params(k_params, RES_SIZE, NGH, ATT_SIZE, NCLASS)

    outs = jax.block_until_ready(fr_forward(feat, params, noise))
    mus, stds, dis_out, pred, encoder_out, h = outs

    assert mus.shape == (B, ATT_SIZE)
    assert stds.shape == (B, ATT_SIZE)
    assert dis_out.shape == (B, 1)
    assert pred.shape == (B, NCLASS)
    assert encoder_out.shape == (B, ATT_SIZE)
    assert h.shape == (B, ATT_SIZE)

    # Loose tolerance: fc1/fc3 use bf16 MXU inputs.
    refs = _fr_reference(feat, params, noise)
    for got, ref in zip(outs, refs):
        assert jnp.allclose(got, ref, rtol=5e-2, atol=5e-2), (
            float(jnp.max(jnp.abs(got - ref))))

    print("KERNEL_OK")
</pallas_src>

<mosaic_0001>
module attributes {stable_mosaic.version = 11 : i64} {
  func.func @_fr_kernel(%arg0: i32, %arg1: memref<8x32xbf16, #tpu.memory_space<vmem>>, %arg2: memref<8x128xf32, #tpu.memory_space<vmem>>, %arg3: memref<32x64xbf16, #tpu.memory_space<vmem>>, %arg4: memref<1x64xf32, #tpu.memory_space<vmem>>, %arg5: memref<64x128xbf16, #tpu.memory_space<vmem>>, %arg6: memref<1x128xf32, #tpu.memory_space<vmem>>, %arg7: memref<64x128xbf16, #tpu.memory_space<vmem>>, %arg8: memref<1x128xf32, #tpu.memory_space<vmem>>, %arg9: memref<1x128xf32, #tpu.memory_space<vmem>>, %arg10: memref<1x1xf32, #tpu.memory_space<vmem>>, %arg11: memref<128x128xf32, #tpu.memory_space<vmem>>, %arg12: memref<1x128xf32, #tpu.memory_space<vmem>>, %arg13: memref<8x768xf32, #tpu.memory_space<vmem>>) attributes {dimension_semantics = [#tpu.dimension_semantics<parallel>], iteration_bounds = array<i64: 1>, scalar_prefetch = 0 : i64, scratch_operands = 0 : i64, tpu.core_type = #tpu.core_type<tc>, window_params = [{transform_indices = @transform_0, window_bounds = array<i64: 8, 32>}, {transform_indices = @transform_1, window_bounds = array<i64: 8, 128>}, {pipeline_mode = #tpu.pipeline_mode<synchronous>, transform_indices = @transform_2, window_bounds = array<i64: 32, 64>}, {pipeline_mode = #tpu.pipeline_mode<synchronous>, transform_indices = @transform_3, window_bounds = array<i64: 1, 64>}, {pipeline_mode = #tpu.pipeline_mode<synchronous>, transform_indices = @transform_4, window_bounds = array<i64: 64, 128>}, {pipeline_mode = #tpu.pipeline_mode<synchronous>, transform_indices = @transform_5, window_bounds = array<i64: 1, 128>}, {pipeline_mode = #tpu.pipeline_mode<synchronous>, transform_indices = @transform_6, window_bounds = array<i64: 64, 128>}, {pipeline_mode = #tpu.pipeline_mode<synchronous>, transform_indices = @transform_7, window_bounds = array<i64: 1, 128>}, {pipeline_mode = #tpu.pipeline_mode<synchronous>, transform_indices = @transform_8, window_bounds = array<i64: 1, 128>}, {pipeline_mode = #tpu.pipeline_mode<synchronous>, transform_indices = @transform_9, window_bounds = array<i64: 1, 1>}, {pipeline_mode = #tpu.pipeline_mode<synchronous>, transform_indices = @transform_10, window_bounds = array<i64: 128, 128>}, {pipeline_mode = #tpu.pipeline_mode<synchronous>, transform_indices = @transform_11, window_bounds = array<i64: 1, 128>}, {transform_indices = @transform_12, window_bounds = array<i64: 8, 768>}]} {
    %c0 = arith.constant 0 : index
    %c0_0 = arith.constant 0 : index
    %0 = vector.load %arg1[%c0, %c0_0] : memref<8x32xbf16, #tpu.memory_space<vmem>>, vector<8x32xbf16>
    %c0_1 = arith.constant 0 : index
    %c0_2 = arith.constant 0 : index
    %1 = vector.load %arg3[%c0_1, %c0_2] : memref<32x64xbf16, #tpu.memory_space<vmem>>, vector<32x64xbf16>
    %cst = arith.constant dense<0.000000e+00> : vector<8x64xf32>
    %2 = tpu.matmul %0, %1, %cst {dimension_numbers = #tpu.dot_dimension_numbers<[1], [0], [0], [1], [0, 0, 1, 1], [], []>} : vector<8x32xbf16>, vector<32x64xbf16>, vector<8x64xf32> -> vector<8x64xf32>
    %c0_3 = arith.constant 0 : index
    %c0_4 = arith.constant 0 : index
    %3 = vector.load %arg4[%c0_3, %c0_4] : memref<1x64xf32, #tpu.memory_space<vmem>>, vector<1x64xf32>
    %4 = vector.broadcast %3 : vector<1x64xf32> to vector<8x64xf32>
    %5 = arith.addf %2, %4 : vector<8x64xf32>
    %cst_5 = arith.constant 0.000000e+00 : f32
    %6 = vector.broadcast %cst_5 : f32 to vector<8x64xf32>
    %7 = arith.cmpf ogt, %5, %6 : vector<8x64xf32>
    %cst_6 = arith.constant 2.000000e-01 : f32
    %8 = vector.broadcast %cst_6 : f32 to vector<8x64xf32>
    %9 = arith.mulf %8, %5 : vector<8x64xf32>
    %10 = arith.select %7, %5, %9 : vector<8x64xi1>, vector<8x64xf32>
    %11 = arith.truncf %10 : vector<8x64xf32> to vector<8x64xbf16>
    %c0_7 = arith.constant 0 : index
    %c0_8 = arith.constant 0 : index
    %12 = vector.load %arg5[%c0_7, %c0_8] : memref<64x128xbf16, #tpu.memory_space<vmem>>, vector<64x128xbf16>
    %cst_9 = arith.constant dense<0.000000e+00> : vector<8x128xf32>
    %13 = tpu.matmul %11, %12, %cst_9 {dimension_numbers = #tpu.dot_dimension_numbers<[1], [0], [0], [1], [0, 0, 1, 1], [], []>} : vector<8x64xbf16>, vector<64x128xbf16>, vector<8x128xf32> -> vector<8x128xf32>
    %c0_10 = arith.constant 0 : index
    %c0_11 = arith.constant 0 : index
    %14 = vector.load %arg6[%c0_10, %c0_11] : memref<1x128xf32, #tpu.memory_space<vmem>>, vector<1x128xf32>
    %15 = vector.broadcast %14 : vector<1x128xf32> to vector<8x128xf32>
    %16 = arith.addf %13, %15 : vector<8x128xf32>
    %c0_12 = arith.constant 0 : index
    %c0_13 = arith.constant 0 : index
    %17 = vector.load %arg7[%c0_12, %c0_13] : memref<64x128xbf16, #tpu.memory_space<vmem>>, vector<64x128xbf16>
    %cst_14 = arith.constant dense<0.000000e+00> : vector<8x128xf32>
    %18 = tpu.matmul %11, %17, %cst_14 {dimension_numbers = #tpu.dot_dimension_numbers<[1], [0], [0], [1], [0, 0, 1, 1], [], []>} : vector<8x64xbf16>, vector<64x128xbf16>, vector<8x128xf32> -> vector<8x128xf32>
    %c0_15 = arith.constant 0 : index
    %c0_16 = arith.constant 0 : index
    %19 = vector.load %arg8[%c0_15, %c0_16] : memref<1x128xf32, #tpu.memory_space<vmem>>, vector<1x128xf32>
    %20 = vector.broadcast %19 : vector<1x128xf32> to vector<8x128xf32>
    %21 = arith.addf %18, %20 : vector<8x128xf32>
    %22 = arith.negf %21 : vector<8x128xf32>
    %23 = math.exp %22 : vector<8x128xf32>
    %cst_17 = arith.constant 1.000000e+00 : f32
    %24 = vector.broadcast %cst_17 : f32 to vector<8x128xf32>
    %25 = arith.addf %24, %23 : vector<8x128xf32>
    %26 = arith.divf %24, %25 : vector<8x128xf32>
    %c0_18 = arith.constant 0 : index
    %c0_19 = arith.constant 0 : index
    %27 = vector.load %arg2[%c0_18, %c0_19] : memref<8x128xf32, #tpu.memory_space<vmem>>, vector<8x128xf32>
    %28 = arith.mulf %27, %26 : vector<8x128xf32>
    %29 = arith.addf %28, %16 : vector<8x128xf32>
    %30 = arith.negf %29 : vector<8x128xf32>
    %31 = math.exp %30 : vector<8x128xf32>
    %cst_20 = arith.constant 1.000000e+00 : f32
    %32 = vector.broadcast %cst_20 : f32 to vector<8x128xf32>
    %33 = arith.addf %32, %31 : vector<8x128xf32>
    %34 = arith.divf %32, %33 : vector<8x128xf32>
    %c0_21 = arith.constant 0 : index
    %c0_22 = arith.constant 0 : index
    %35 = vector.load %arg9[%c0_21, %c0_22] : memref<1x128xf32, #tpu.memory_space<vmem>>, vector<1x128xf32>
    %36 = vector.broadcast %35 : vector<1x128xf32> to vector<8x128xf32>
    %37 = arith.mulf %29, %36 : vector<8x128xf32>
    %cst_23 = arith.constant dense<0.000000e+00> : vector<8xf32>
    %38 = vector.multi_reduction <add>, %37, %cst_23 [1] : vector<8x128xf32> to vector<8xf32>
    %39 = vector.shape_cast %38 : vector<8xf32> to vector<8x1xf32>
    %c0_24 = arith.constant 0 : index
    %c0_25 = arith.constant 0 : index
    %40 = vector.load %arg10[%c0_24, %c0_25] : memref<1x1xf32, #tpu.memory_space<vmem>>, vector<1x1xf32>
    %41 = vector.broadcast %40 : vector<1x1xf32> to vector<8x1xf32>
    %42 = arith.addf %39, %41 : vector<8x1xf32>
    %43 = vector.shape_cast %42 : vector<8x1xf32> to vector<8x1xf32>
    %44 = vector.broadcast %43 : vector<8x1xf32> to vector<8x128xf32>
    %c0_26 = arith.constant 0 : index
    %c0_27 = arith.constant 0 : index
    %45 = vector.load %arg11[%c0_26, %c0_27] : memref<128x128xf32, #tpu.memory_space<vmem>>, vector<128x128xf32>
    %cst_28 = arith.constant dense<0.000000e+00> : vector<8x128xf32>
    %46 = tpu.matmul %16, %45, %cst_28 {dimension_numbers = #tpu.dot_dimension_numbers<[1], [0], [0], [1], [0, 0, 1, 1], [], []>} : vector<8x128xf32>, vector<128x128xf32>, vector<8x128xf32> -> vector<8x128xf32>
    %c0_29 = arith.constant 0 : index
    %c0_30 = arith.constant 0 : index
    %47 = vector.load %arg12[%c0_29, %c0_30] : memref<1x128xf32, #tpu.memory_space<vmem>>, vector<1x128xf32>
    %48 = vector.broadcast %47 : vector<1x128xf32> to vector<8x128xf32>
    %49 = arith.addf %46, %48 : vector<8x128xf32>
    %cst_31 = arith.constant dense<0xFF800000> : vector<8xf32>
    %50 = vector.multi_reduction <maximumf>, %49, %cst_31 [1] : vector<8x128xf32> to vector<8xf32>
    %51 = vector.shape_cast %50 : vector<8xf32> to vector<8x1xf32>
    %52 = vector.broadcast %51 : vector<8x1xf32> to vector<8x128xf32>
    %53 = arith.subf %49, %52 : vector<8x128xf32>
    %54 = math.exp %53 : vector<8x128xf32>
    %cst_32 = arith.constant dense<0.000000e+00> : vector<8xf32>
    %55 = vector.multi_reduction <add>, %54, %cst_32 [1] : vector<8x128xf32> to vector<8xf32>
    %56 = vector.shape_cast %55 : vector<8xf32> to vector<8x1xf32>
    %57 = math.log %56 : vector<8x1xf32>
    %58 = vector.broadcast %57 : vector<8x1xf32> to vector<8x128xf32>
    %59 = arith.subf %53, %58 : vector<8x128xf32>
    %c0_33 = arith.constant 0 : index
    %c0_34 = arith.constant 0 : index
    %60 = vector.load %arg13[%c0_33, %c0_34] : memref<8x768xf32, #tpu.memory_space<vmem>>, vector<8x128xf32>
    tpu.vector_store %arg13[%c0_33, %c0_34], %16 {strides = array<i32>} : memref<8x768xf32, #tpu.memory_space<vmem>>, vector<8x128xf32>,
    %c0_35 = arith.constant 0 : index
    %c128 = arith.constant 128 : index
    %61 = vector.load %arg13[%c0_35, %c128] : memref<8x768xf32, #tpu.memory_space<vmem>>, vector<8x128xf32>
    tpu.vector_store %arg13[%c0_35, %c128], %26 {strides = array<i32>} : memref<8x768xf32, #tpu.memory_space<vmem>>, vector<8x128xf32>,
    %c0_36 = arith.constant 0 : index
    %c256 = arith.constant 256 : index
    %62 = vector.load %arg13[%c0_36, %c256] : memref<8x768xf32, #tpu.memory_space<vmem>>, vector<8x128xf32>
    tpu.vector_store %arg13[%c0_36, %c256], %29 {strides = array<i32>} : memref<8x768xf32, #tpu.memory_space<vmem>>, vector<8x128xf32>,
    %c0_37 = arith.constant 0 : index
    %c384 = arith.constant 384 : index
    %63 = vector.load %arg13[%c0_37, %c384] : memref<8x768xf32, #tpu.memory_space<vmem>>, vector<8x128xf32>
    tpu.vector_store %arg13[%c0_37, %c384], %34 {strides = array<i32>} : memref<8x768xf32, #tpu.memory_space<vmem>>, vector<8x128xf32>,
    %c0_38 = arith.constant 0 : index
    %c512 = arith.constant 512 : index
    %64 = vector.load %arg13[%c0_38, %c512] : memref<8x768xf32, #tpu.memory_space<vmem>>, vector<8x128xf32>
    tpu.vector_store %arg13[%c0_38, %c512], %59 {strides = array<i32>} : memref<8x768xf32, #tpu.memory_space<vmem>>, vector<8x128xf32>,
    %c0_39 = arith.constant 0 : index
    %c640 = arith.constant 640 : index
    %65 = vector.load %arg13[%c0_39, %c640] : memref<8x768xf32, #tpu.memory_space<vmem>>, vector<8x128xf32>
    tpu.vector_store %arg13[%c0_39, %c640], %44 {strides = array<i32>} : memref<8x768xf32, #tpu.memory_space<vmem>>, vector<8x128xf32>,
    return
  }
  func.func @transform_0(%arg0: i32) -> (i32, i32) {
    %c0_i32 = arith.constant 0 : i32
    %c0_i32_0 = arith.constant 0 : i32
    return %arg0, %c0_i32 : i32, i32
  }
  func.func @transform_1(%arg0: i32) -> (i32, i32) {
    %c0_i32 = arith.constant 0 : i32
    %c0_i32_0 = arith.constant 0 : i32
    return %arg0, %c0_i32 : i32, i32
  }
  func.func @transform_2(%arg0: i32) -> (i32, i32) {
    %c0_i32 = arith.constant 0 : i32
    %c0_i32_0 = arith.constant 0 : i32
    %c0_i32_1 = arith.constant 0 : i32
    return %c0_i32, %c0_i32_0 : i32, i32
  }
  func.func @transform_3(%arg0: i32) -> (i32, i32) {
    %c0_i32 = arith.constant 0 : i32
    %c0_i32_0 = arith.constant 0 : i32
    %c0_i32_1 = arith.constant 0 : i32
    return %c0_i32, %c0_i32_0 : i32, i32
  }
  func.func @transform_4(%arg0: i32) -> (i32, i32) {
    %c0_i32 = arith.constant 0 : i32
    %c0_i32_0 = arith.constant 0 : i32
    %c0_i32_1 = arith.constant 0 : i32
    return %c0_i32, %c0_i32_0 : i32, i32
  }
  func.func @transform_5(%arg0: i32) -> (i32, i32) {
    %c0_i32 = arith.constant 0 : i32
    %c0_i32_0 = arith.constant 0 : i32
    %c0_i32_1 = arith.constant 0 : i32
    return %c0_i32, %c0_i32_0 : i32, i32
  }
  func.func @transform_6(%arg0: i32) -> (i32, i32) {
    %c0_i32 = arith.constant 0 : i32
    %c0_i32_0 = arith.constant 0 : i32
    %c0_i32_1 = arith.constant 0 : i32
    return %c0_i32, %c0_i32_0 : i32, i32
  }
  func.func @transform_7(%arg0: i32) -> (i32, i32) {
    %c0_i32 = arith.constant 0 : i32
    %c0_i32_0 = arith.constant 0 : i32
    %c0_i32_1 = arith.constant 0 : i32
    return %c0_i32, %c0_i32_0 : i32, i32
  }
  func.func @transform_8(%arg0: i32) -> (i32, i32) {
    %c0_i32 = arith.constant 0 : i32
    %c0_i32_0 = arith.constant 0 : i32
    %c0_i32_1 = arith.constant 0 : i32
    return %c0_i32, %c0_i32_0 : i32, i32
  }
  func.func @transform_9(%arg0: i32) -> (i32, i32) {
    %c0_i32 = arith.constant 0 : i32
    %c0_i32_0 = arith.constant 0 : i32
    %c0_i32_1 = arith.constant 0 : i32
    return %c0_i32, %c0_i32_0 : i32, i32
  }
  func.func @transform_10(%arg0: i32) -> (i32, i32) {
    %c0_i32 = arith.constant 0 : i32
    %c0_i32_0 = arith.constant 0 : i32
    %c0_i32_1 = arith.constant 0 : i32
    return %c0_i32, %c0_i32_0 : i32, i32
  }
  func.func @transform_11(%arg0: i32) -> (i32, i32) {
    %c0_i32 = arith.constant 0 : i32
    %c0_i32_0 = arith.constant 0 : i32
    %c0_i32_1 = arith.constant 0 : i32
    return %c0_i32, %c0_i32_0 : i32, i32
  }
  func.func @transform_12(%arg0: i32) -> (i32, i32) {
    %c0_i32 = arith.constant 0 : i32
    %c0_i32_0 = arith.constant 0 : i32
    return %arg0, %c0_i32 : i32, i32
  }
}

</mosaic_0001>

<llo_original>
// kernel: tpu_custom_call.1
$region0: #{tpu_custom_call.1}
  #allocation0 [shape = 'u32[]', space=smem, size = 0x4, offset = 0x4, fixed_abs, tag = 'smem constant byte address 0x4 - core index']
  #allocation1 [shape = 'u32[72,128]{1,0:T(1,128)}', space=vmem, size = 0x9000, scoped, tag = 'internal scratch']
  #allocation2 [shape = 'f32[1,1]{1,0:T(1,128)S(1)}', space=vmem, size = 0x200, scoped, tag = 'scoped memory for tpu_custom_call.1']
  %s0 = inlined_call_operand.hbm [shape: bf16[8,32], index: 0, kind: input, shape index: {}]
  %s1 = inlined_call_operand.hbm [shape: f32[8,128], index: 1, kind: input, shape index: {}]
  %s2 = inlined_call_operand.hbm [shape: bf16[32,64], index: 2, kind: input, shape index: {}]
  %s3 = inlined_call_operand.vmem [shape: f32[1,64], index: 3, kind: input, shape index: {}]
  %s4 = inlined_call_operand.hbm [shape: bf16[64,128], index: 4, kind: input, shape index: {}]
  %s5 = inlined_call_operand.vmem [shape: f32[1,128], index: 5, kind: input, shape index: {}]
  %s6 = inlined_call_operand.hbm [shape: bf16[64,128], index: 6, kind: input, shape index: {}]
  %s7 = inlined_call_operand.vmem [shape: f32[1,128], index: 7, kind: input, shape index: {}]
  %s8 = inlined_call_operand.vmem [shape: f32[1,128], index: 8, kind: input, shape index: {}]
  %s9 = inlined_call_operand.<no memory space> [shape: f32[1,1], index: 9, kind: input, shape index: {}]
  %s10 = inlined_call_operand.hbm [shape: f32[128,128], index: 10, kind: input, shape index: {}]
  %s11 = inlined_call_operand.vmem [shape: f32[1,128], index: 11, kind: input, shape index: {}]
  %s12 = inlined_call_operand.hbm [shape: f32[8,768], index: 12, kind: output, shape index: {}]
  %s13 = sld [smem:[#allocation0]]
  $region82: #{tpu_custom_call.1} parent=0
    _
  %s15 = ssub.s32 1, %s13
  %s16 = scalar_select 0, %s15, %s13
  %v17 = vstv %s9
  %18 = vst [vmem:[#allocation2] sm:$0x1] %v17
  $region1: #{tpu_custom_call.1} parent=0
    #allocation3 [shape = 'u8[2048]{0}', space=vmem, size = 0x800, scoped, tag = 'input window, operand 0, single buffered']
    #allocation4 [shape = 's32[1]{0}', space=sflag, size = 0x4, scoped, tag = 'scoped memory for tpu_custom_call.1']
    #allocation5 [shape = 's32[1]{0}', space=sflag, size = 0x4, scoped, tag = 'scoped memory for tpu_custom_call.1']
    #allocation6 [shape = 'u8[4096]{0}', space=vmem, size = 0x1000, scoped, tag = 'input window, operand 1, single buffered']
    #allocation7 [shape = 's32[1]{0}', space=sflag, size = 0x4, scoped, tag = 'scoped memory for tpu_custom_call.1']
    #allocation8 [shape = 'u8[8192]{0}', space=vmem, size = 0x2000, scoped, tag = 'input window, operand 2, single buffered']
    #allocation9 [shape = 'u8[16384]{0}', space=vmem, size = 0x4000, scoped, tag = 'input window, operand 4, single buffered']
    #allocation10 [shape = 's32[1]{0}', space=sflag, size = 0x4, scoped, tag = 'scoped memory for tpu_custom_call.1']
    #allocation11 [shape = 'u8[16384]{0}', space=vmem, size = 0x4000, scoped, tag = 'input window, operand 6, single buffered']
    #allocation12 [shape = 'u8[65536]{0}', space=vmem, size = 0x10000, scoped, tag = 'input window, operand 10, single buffered']
    #allocation13 [shape = 's32[1]{0}', space=sflag, size = 0x4, scoped, tag = 'scoped memory for tpu_custom_call.1']
    #allocation14 [shape = 'u8[24576]{0}', space=vmem, size = 0x6000, scoped, tag = 'output window, operand 0, single buffered']
    %19 = vsyncpa [#allocation4], 0
    %20 = vsyncpa [#allocation7], 0
    %21 = vsyncpa [#allocation10], 0
    %22 = vsyncpa [#allocation13], 0
    %23 = vsyncpa [#allocation5], 0
    // Predicated region
    $region2: #{tpu_custom_call.1} parent=1 // pred_check
      _
    $region3: #{tpu_custom_call.1} parent=1 // pred_check_branch
      %25 = sbr.rel (0) target = $region5
    $region4: #{tpu_custom_call.1} parent=1 // pred_region
      %27 = vsyncadd [#allocation4], 0
      %s29 = sshll.u32 %s0, 4
      %s30 = int_to_ptr.hbm [resolvable:$true] %s29
      %s31 = sshll.u32 [#allocation3], 4
      %s32 = int_to_ptr.vmem [resolvable:$true] %s31
      %34 = dma.hbm_to_vmem [thread:$0]  %s30, 64, %s32, [#allocation4]
    $region5: #{tpu_custom_call.1} parent=1 // pred_fallthru
      _
    // Predicated region
    $region6: #{tpu_custom_call.1} parent=1 // pred_check
      _
    $region7: #{tpu_custom_call.1} parent=1 // pred_check_branch
      %36 = sbr.rel (0) target = $region9
    $region8: #{tpu_custom_call.1} parent=1 // pred_region
      %38 = vsyncadd [#allocation7], 0
      %s40 = sshll.u32 %s1, 4
      %s41 = int_to_ptr.hbm [resolvable:$true] %s40
      %s42 = sshll.u32 [#allocation6], 4
      %s43 = int_to_ptr.vmem [resolvable:$true] %s42
      %45 = dma.hbm_to_vmem [thread:$0]  %s41, 128, %s43, [#allocation7]
    $region9: #{tpu_custom_call.1} parent=1 // pred_fallthru
      _
    // Predicated region
    $region10: #{tpu_custom_call.1} parent=1 // pred_check
      _
    $region11: #{tpu_custom_call.1} parent=1 // pred_check_branch
      %47 = sbr.rel (0) target = $region13
    $region12: #{tpu_custom_call.1} parent=1 // pred_region
      %49 = vsyncadd [#allocation7], 0
      %s50 = sshll.u32 %s2, 4
      %s51 = int_to_ptr.hbm [resolvable:$true] %s50
      %s52 = sshll.u32 [#allocation8], 4
      %s53 = int_to_ptr.vmem [resolvable:$true] %s52
      %58 = dma.hbm_to_vmem [thread:$0]  %s51, 256, %s53, [#allocation7], 64, 64, 4
    $region13: #{tpu_custom_call.1} parent=1 // pred_fallthru
      _
    // Predicated region
    $region14: #{tpu_custom_call.1} parent=1 // pred_check
      _
    $region15: #{tpu_custom_call.1} parent=1 // pred_check_branch
      %60 = sbr.rel (0) target = $region17
    $region16: #{tpu_custom_call.1} parent=1 // pred_region
      _
    $region17: #{tpu_custom_call.1} parent=1 // pred_fallthru
      _
    // Predicated region
    $region18: #{tpu_custom_call.1} parent=1 // pred_check
      _
    $region19: #{tpu_custom_call.1} parent=1 // pred_check_branch
      %62 = sbr.rel (0) target = $region21
    $region20: #{tpu_custom_call.1} parent=1 // pred_region
      %64 = vsyncadd [#allocation10], 0
      %s65 = sshll.u32 %s4, 4
      %s66 = int_to_ptr.hbm [resolvable:$true] %s65
      %s67 = sshll.u32 [#allocation9], 4
      %s68 = int_to_ptr.vmem [resolvable:$true] %s67
      %73 = dma.hbm_to_vmem [thread:$0]  %s66, 512, %s68, [#allocation10], 64, 64, 4
    $region21: #{tpu_custom_call.1} parent=1 // pred_fallthru
      _
    // Predicated region
    $region22: #{tpu_custom_call.1} parent=1 // pred_check
      _
    $region23: #{tpu_custom_call.1} parent=1 // pred_check_branch
      %75 = sbr.rel (0) target = $region25
    $region24: #{tpu_custom_call.1} parent=1 // pred_region
      _
    $region25: #{tpu_custom_call.1} parent=1 // pred_fallthru
      _
    // Predicated region
    $region26: #{tpu_custom_call.1} parent=1 // pred_check
      _
    $region27: #{tpu_custom_call.1} parent=1 // pred_check_branch
      %77 = sbr.rel (0) target = $region29
    $region28: #{tpu_custom_call.1} parent=1 // pred_region
      %79 = vsyncadd [#allocation10], 0
      %s80 = sshll.u32 %s6, 4
      %s81 = int_to_ptr.hbm [resolvable:$true] %s80
      %s82 = sshll.u32 [#allocation11], 4
      %s83 = int_to_ptr.vmem [resolvable:$true] %s82
      %88 = dma.hbm_to_vmem [thread:$0]  %s81, 512, %s83, [#allocation10], 64, 64, 4
    $region29: #{tpu_custom_call.1} parent=1 // pred_fallthru
      _
    // Predicated region
    $region30: #{tpu_custom_call.1} parent=1 // pred_check
      _
    $region31: #{tpu_custom_call.1} parent=1 // pred_check_branch
      %90 = sbr.rel (0) target = $region33
    $region32: #{tpu_custom_call.1} parent=1 // pred_region
      _
    $region33: #{tpu_custom_call.1} parent=1 // pred_fallthru
      _
    // Predicated region
    $region34: #{tpu_custom_call.1} parent=1 // pred_check
      _
    $region35: #{tpu_custom_call.1} parent=1 // pred_check_branch
      %92 = sbr.rel (0) target = $region37
    $region36: #{tpu_custom_call.1} parent=1 // pred_region
      _
    $region37: #{tpu_custom_call.1} parent=1 // pred_fallthru
      _
    // Predicated region
    $region38: #{tpu_custom_call.1} parent=1 // pred_check
      _
    $region39: #{tpu_custom_call.1} parent=1 // pred_check_branch
      %94 = sbr.rel (0) target = $region41
    $region40: #{tpu_custom_call.1} parent=1 // pred_region
      _
    $region41: #{tpu_custom_call.1} parent=1 // pred_fallthru
      _
    // Predicated region
    $region42: #{tpu_custom_call.1} parent=1 // pred_check
      _
    $region43: #{tpu_custom_call.1} parent=1 // pred_check_branch
      %96 = sbr.rel (0) target = $region45
    $region44: #{tpu_custom_call.1} parent=1 // pred_region
      %98 = vsyncadd [#allocation13], 0
      %s99 = sshll.u32 %s10, 4
      %s100 = int_to_ptr.hbm [resolvable:$true] %s99
      %s101 = sshll.u32 [#allocation12], 4
      %s102 = int_to_ptr.vmem [resolvable:$true] %s101
      %107 = dma.hbm_to_vmem [thread:$0]  %s100, 2048, %s102, [#allocation13], 128, 128, 8
    $region45: #{tpu_custom_call.1} parent=1 // pred_fallthru
      _
    // Predicated region
    $region46: #{tpu_custom_call.1} parent=1 // pred_check
      _
    $region47: #{tpu_custom_call.1} parent=1 // pred_check_branch
      %109 = sbr.rel (0) target = $region49
    $region48: #{tpu_custom_call.1} parent=1 // pred_region
      _
    $region49: #{tpu_custom_call.1} parent=1 // pred_fallthru
      _
    // Predicated region
    $region50: #{tpu_custom_call.1} parent=1 // pred_check
      _
    $region51: #{tpu_custom_call.1} parent=1 // pred_check_branch
      %111 = sbr.rel (0) target = $region53
    $region52: #{tpu_custom_call.1} parent=1 // pred_region
      %113 = dma.done [#allocation4], 64
    $region53: #{tpu_custom_call.1} parent=1 // pred_fallthru
      _
    // Predicated region
    $region54: #{tpu_custom_call.1} parent=1 // pred_check
      _
    $region55: #{tpu_custom_call.1} parent=1 // pred_check_branch
      %115 = sbr.rel (0) target = $region57
    $region56: #{tpu_custom_call.1} parent=1 // pred_region
      %117 = dma.done [#allocation7], 128
    $region57: #{tpu_custom_call.1} parent=1 // pred_fallthru
      _
    // Predicated region
    $region58: #{tpu_custom_call.1} parent=1 // pred_check
      _
    $region59: #{tpu_custom_call.1} parent=1 // pred_check_branch
      %119 = sbr.rel (0) target = $region61
    $region60: #{tpu_custom_call.1} parent=1 // pred_region
      %121 = dma.done [#allocation7], 256
    $region61: #{tpu_custom_call.1} parent=1 // pred_fallthru
      _
    // Predicated region
    $region62: #{tpu_custom_call.1} parent=1 // pred_check
      _
    $region63: #{tpu_custom_call.1} parent=1 // pred_check_branch
      %123 = sbr.rel (0) target = $region65
    $region64: #{tpu_custom_call.1} parent=1 // pred_region
      %125 = dma.done [#allocation10], 512
    $region65: #{tpu_custom_call.1} parent=1 // pred_fallthru
      _
    // Predicated region
    $region66: #{tpu_custom_call.1} parent=1 // pred_check
      _
    $region67: #{tpu_custom_call.1} parent=1 // pred_check_branch
      %127 = sbr.rel (0) target = $region69
    $region68: #{tpu_custom_call.1} parent=1 // pred_region
      %129 = dma.done [#allocation10], 512
    $region69: #{tpu_custom_call.1} parent=1 // pred_fallthru
      _
    // Predicated region
    $region70: #{tpu_custom_call.1} parent=1 // pred_check
      _
    $region71: #{tpu_custom_call.1} parent=1 // pred_check_branch
      %131 = sbr.rel (0) target = $region73
    $region72: #{tpu_custom_call.1} parent=1 // pred_region
      %133 = dma.done [#allocation13], 2048
    $region73: #{tpu_custom_call.1} parent=1 // pred_fallthru
      _
    %v135 = vld [vmem:[#allocation3] sm:$0xf]
    %v136 = vld [vmem:[#allocation8] sm:$0xf]
    %v137 = vld [vmem:[#allocation8 + $0x4] sm:$0xf]
    %v138 = vld [vmem:[#allocation8 + $0x8] sm:$0xf]
    %v139 = vld [vmem:[#allocation8 + $0xc] sm:$0xf]
    %v140 = vld [vmem:[%s3] sm:$0x1]
    %v142 = vperm.slane %v140, 0
    %v148 = vunpack.c.l.b16 %v136
    %v149 = vunpack.c.l.b16 %v137
    %v150 = vunpack.c.l.b16 %v138
    %v151 = vunpack.c.l.b16 %v139
    %v152 = vpack.c.b16 %v149, %v148
    %v153 = vpack.c.b16 %v151, %v150
    %vm156 = vcmask 261120
    %v158 = vsel %vm156, %v135, 0
    %160 = vmatpush.bf16.msra.mxu0 0
    %161 = vmatpush.bf16.msra.mxu0 0
    %162 = vmatpush.bf16.msra.mxu0 0
    %163 = vmatpush.bf16.msra.mxu0 0
    %164 = vmatpush.bf16.msra.mxu0 0
    %165 = vmatpush.bf16.msra.mxu0 0
    %166 = vmatpush.bf16.msra.mxu0 %v153
    %167 = vmatpush.bf16.msra.mxu0 %v152
    %168 = vmatmul.bf16.gmra.mxu0 %v158
    %v169 = vpop.f32.mrf.mxu0
    %v170 = vadd.f32 %v142, %v169
    %v171 = vpop.f32.mrf.mxu0
    %172 = vdwg.mxu0
    %vm173 = vcmp.gt.f32.partialorder %v170, 0.0
    %v174 = vmul.f32 %v170, 0.2
    %v175 = vsel %vm173, %v170, %v174
    %v176 = vpack.c.bf16 %v175, %v175
    %v177 = vld [vmem:[#allocation9] sm:$0xf]
    %v178 = vld [vmem:[#allocation9 + $0x4] sm:$0xf]
    %v179 = vld [vmem:[#allocation9 + $0x8] sm:$0xf]
    %v180 = vld [vmem:[#allocation9 + $0xc] sm:$0xf]
    %v181 = vld [vmem:[#allocation9 + $0x10] sm:$0xf]
    %v182 = vld [vmem:[#allocation9 + $0x14] sm:$0xf]
    %v183 = vld [vmem:[#allocation9 + $0x18] sm:$0xf]
    %v184 = vld [vmem:[#allocation9 + $0x1c] sm:$0xf]
    %v185 = vld [vmem:[%s5] sm:$0x1]
    %v187 = vperm.slane %v185, 0
    %v197 = vunpack.c.l.b16 %v177
    %v198 = vunpack.c.l.b16 %v178
    %v199 = vunpack.c.l.b16 %v179
    %v200 = vunpack.c.l.b16 %v180
    %v201 = vunpack.c.l.b16 %v181
    %v202 = vunpack.c.l.b16 %v182
    %v203 = vunpack.c.l.b16 %v183
    %v204 = vunpack.c.l.b16 %v184
    %v205 = vpack.c.b16 %v198, %v197
    %v206 = vpack.c.b16 %v200, %v199
    %v207 = vpack.c.b16 %v202, %v201
    %v208 = vpack.c.b16 %v204, %v203
    %vm213 = vcmask 523264
    %v215 = vsel %vm213, %v176, 0
    %217 = vmatpush.bf16.msra.mxu0 0
    %218 = vmatpush.bf16.msra.mxu0 0
    %219 = vmatpush.bf16.msra.mxu0 0
    %220 = vmatpush.bf16.msra.mxu0 0
    %221 = vmatpush.bf16.msra.mxu0 %v208
    %222 = vmatpush.bf16.msra.mxu0 %v207
    %223 = vmatpush.bf16.msra.mxu0 %v206
    %224 = vmatpush.bf16.msra.mxu0 %v205
    %225 = vmatmul.bf16.gmra.mxu0 %v215
    %v226 = vpop.f32.mrf.mxu0
    %v227 = vadd.f32 %v187, %v226
    %v228 = vpop.f32.mrf.mxu0
    %229 = vdwg.mxu0
    %v230 = vld [vmem:[#allocation11] sm:$0xf]
    %v231 = vld [vmem:[#allocation11 + $0x4] sm:$0xf]
    %v232 = vld [vmem:[#allocation11 + $0x8] sm:$0xf]
    %v233 = vld [vmem:[#allocation11 + $0xc] sm:$0xf]
    %v234 = vld [vmem:[#allocation11 + $0x10] sm:$0xf]
    %v235 = vld [vmem:[#allocation11 + $0x14] sm:$0xf]
    %v236 = vld [vmem:[#allocation11 + $0x18] sm:$0xf]
    %v237 = vld [vmem:[#allocation11 + $0x1c] sm:$0xf]
    %v238 = vld [vmem:[%s7] sm:$0x1]
    %v240 = vperm.slane %v238, 0
    %v250 = vunpack.c.l.b16 %v230
    %v251 = vunpack.c.l.b16 %v231
    %v252 = vunpack.c.l.b16 %v232
    %v253 = vunpack.c.l.b16 %v233
    %v254 = vunpack.c.l.b16 %v234
    %v255 = vunpack.c.l.b16 %v235
    %v256 = vunpack.c.l.b16 %v236
    %v257 = vunpack.c.l.b16 %v237
    %v258 = vpack.c.b16 %v251, %v250
    %v259 = vpack.c.b16 %v253, %v252
    %v260 = vpack.c.b16 %v255, %v254
    %v261 = vpack.c.b16 %v257, %v256
    %266 = vmatpush.bf16.msra.mxu0 0
    %267 = vmatpush.bf16.msra.mxu0 0
    %268 = vmatpush.bf16.msra.mxu0 0
    %269 = vmatpush.bf16.msra.mxu0 0
    %270 = vmatpush.bf16.msra.mxu0 %v261
    %271 = vmatpush.bf16.msra.mxu0 %v260
    %272 = vmatpush.bf16.msra.mxu0 %v259
    %273 = vmatpush.bf16.msra.mxu0 %v258
    %274 = vmatmul.bf16.gmra.mxu0 %v215
    %v275 = vpop.f32.mrf.mxu0
    %v276 = vadd.f32 %v240, %v275
    %v277 = vpop.f32.mrf.mxu0
    %278 = vdwg.mxu0
    %v279 = vxor.u32 %v276, 2147483648
    %v280 = vmul.f32 %v279, 1.442695
    %v281 = vpow.pop %v280
    %v282 = vadd.f32 %v281, 1.0
    %v283 = vrcp.pop %v282
    %v284 = vmul.f32 %v282, %v283
    %v285 = vsub.f32 1.0, %v284
    %v286 = vmul.f32 %v283, %v285
    %v287 = vadd.f32 %v283, %v286
    %vm288 = vweird.f32 %v282
    %vm289 = vweird.f32 %v283
    %vm290 = vmor %vm288, %vm289
    %v291 = vsel %vm290, %v283, %v287
    %v292 = vand.u32 2147483647, %v282
    %vm293 = vcmp.eq.f32.partialorder %v292, 8.507059e+37
    %v294 = vand.u32 %v282, 2147483648
    %v295 = vor.u32 1.1754944e-38, %v294
    %v296 = vsel %vm293, %v295, %v291
    %v297 = vmul.f32 1.0, %v296
    %v298 = vld [vmem:[#allocation6] sm:$0xff]
    %v299 = vmul.f32 %v298, %v297
    %v300 = vadd.f32 %v299, %v227
    %v301 = vxor.u32 %v300, 2147483648
    %v302 = vmul.f32 %v301, 1.442695
    %v303 = vpow.pop %v302
    %v304 = vadd.f32 %v303, 1.0
    %v305 = vrcp.pop %v304
    %v306 = vmul.f32 %v304, %v305
    %v307 = vsub.f32 1.0, %v306
    %v308 = vmul.f32 %v305, %v307
    %v309 = vadd.f32 %v305, %v308
    %vm310 = vweird.f32 %v304
    %vm311 = vweird.f32 %v305
    %vm312 = vmor %vm310, %vm311
    %v313 = vsel %vm312, %v305, %v309
    %v314 = vand.u32 2147483647, %v304
    %vm315 = vcmp.eq.f32.partialorder %v314, 8.507059e+37
    %v316 = vand.u32 %v304, 2147483648
    %v317 = vor.u32 1.1754944e-38, %v316
    %v318 = vsel %vm315, %v317, %v313
    %v319 = vmul.f32 1.0, %v318
    %v320 = vld [vmem:[%s8] sm:$0x1]
    %v322 = vperm.slane %v320, 0
    %v324 = vmul.f32 %v300, %v322
    %325 = vadd.xlane.f32.xlu0 %v324
    %v326 = vpop.xlane.xlu0 %325
    %v327 = vld [vmem:[#allocation2] sm:$0x1]
    %v329 = vperm.slane %v327, 0
    %v331 = vadd.f32 %v326, %v329
    %333 = vset.pattern.permute.xlu0 0
    %334 = vperm.xlu0 %333, %v331
    %v335 = vpop.permute.xlu0 %334
    %v337 = vld [vmem:[#allocation12] sm:$0xff]
    %v338 = vld [vmem:[#allocation12 + $0x8] sm:$0xff]
    %v339 = vld [vmem:[#allocation12 + $0x10] sm:$0xff]
    %v340 = vld [vmem:[#allocation12 + $0x18] sm:$0xff]
    %v341 = vld [vmem:[#allocation12 + $0x20] sm:$0xff]
    %v342 = vld [vmem:[#allocation12 + $0x28] sm:$0xff]
    %v343 = vld [vmem:[#allocation12 + $0x30] sm:$0xff]
    %v344 = vld [vmem:[#allocation12 + $0x38] sm:$0xff]
    %v345 = vld [vmem:[#allocation12 + $0x40] sm:$0xff]
    %v346 = vld [vmem:[#allocation12 + $0x48] sm:$0xff]
    %v347 = vld [vmem:[#allocation12 + $0x50] sm:$0xff]
    %v348 = vld [vmem:[#allocation12 + $0x58] sm:$0xff]
    %v349 = vld [vmem:[#allocation12 + $0x60] sm:$0xff]
    %v350 = vld [vmem:[#allocation12 + $0x68] sm:$0xff]
    %v351 = vld [vmem:[#allocation12 + $0x70] sm:$0xff]
    %v352 = vld [vmem:[#allocation12 + $0x78] sm:$0xff]
    %v353 = vld [vmem:[%s11] sm:$0x1]
    %v355 = vperm.slane %v353, 0
    %357 = vmatpush.msra.mxu0 %v352
    %358 = vmatpush.msra.mxu0 %v351
    %359 = vmatpush.msra.mxu0 %v350
    %360 = vmatpush.msra.mxu0 %v349
    %361 = vmatpush.msra.mxu0 %v348
    %362 = vmatpush.msra.mxu0 %v347
    %363 = vmatpush.msra.mxu0 %v346
    %364 = vmatpush.msra.mxu0 %v345
    %365 = vmatpush.msra.mxu0 %v344
    %366 = vmatpush.msra.mxu0 %v343
    %367 = vmatpush.msra.mxu0 %v342
    %368 = vmatpush.msra.mxu0 %v341
    %369 = vmatpush.msra.mxu0 %v340
    %370 = vmatpush.msra.mxu0 %v339
    %371 = vmatpush.msra.mxu0 %v338
    %372 = vmatpush.msra.mxu0 %v337
    %373 = vmatmul.f32.gmra.mxu0 %v227
    %v374 = vpop.f32.mrf.mxu0
    %v375 = vadd.f32 %v355, %v374
    %376 = vdwg.mxu0
    %377 = vmax.xlane.f32.xlu0 %v375
    %v378 = vpop.xlane.xlu0 %377
    %v379 = vsub.f32 %v375, %v378
    %v380 = vmul.f32 %v379, 1.442695
    %v381 = vpow.pop %v380
    %382 = vadd.xlane.f32.xlu0 %v381
    %v383 = vpop.xlane.xlu0 %382
    %v384 = vlog2.pop %v383
    %v385 = vmul.f32 %v384, 0.6931472
    %v386 = vsub.f32 %v379, %v385
    %387 = vst [vmem:[#allocation14] sm:$0xff] %v227
    %388 = vst [vmem:[#allocation14 + $0x8] sm:$0xff] %v297
    %389 = vst [vmem:[#allocation14 + $0x10] sm:$0xff] %v300
    %390 = vst [vmem:[#allocation14 + $0x18] sm:$0xff] %v319
    %391 = vst [vmem:[#allocation14 + $0x20] sm:$0xff] %v386
    %392 = vst [vmem:[#allocation14 + $0x28] sm:$0xff] %v335
    // Predicated region
    $region74: #{tpu_custom_call.1} parent=1 // pred_check
      _
    $region75: #{tpu_custom_call.1} parent=1 // pred_check_branch
      %394 = sbr.rel (0) target = $region77
    $region76: #{tpu_custom_call.1} parent=1 // pred_region
      %396 = vsyncadd [#allocation5], 0
      %s398 = sshll.u32 [#allocation14], 4
      %s399 = int_to_ptr.vmem [resolvable:$true] %s398
      %s400 = sshll.u32 %s12, 4
      %s401 = int_to_ptr.hbm [resolvable:$true] %s400
      %403 = dma.vmem_to_hbm [thread:$0]  %s399, 768, %s401, [#allocation5]
    $region77: #{tpu_custom_call.1} parent=1 // pred_fallthru
      _
    // Predicated region
    $region78: #{tpu_custom_call.1} parent=1 // pred_check
      _
    $region79: #{tpu_custom_call.1} parent=1 // pred_check_branch
      %405 = sbr.rel (0) target = $region81
    $region80: #{tpu_custom_call.1} parent=1 // pred_region
      %407 = dma.done [#allocation5], 768
    $region81: #{tpu_custom_call.1} parent=1 // pred_fallthru
      _
    %408 = vsyncpa [#allocation4], 1
    %409 = vsyncpa [#allocation7], 1
    %410 = vsyncpa [#allocation10], 1
    %411 = vsyncpa [#allocation13], 1
    %412 = vsyncpa [#allocation5], 1

</llo_original>
